<compile_context>
chip_gen: v7x
topology: tpu7x:2x2x1
jax: 0.10.0
libtpu: 0.0.40
codegen_flags: <defaults>
</compile_context>

<pallas_src>
import numpy as np
import jax
import jax.numpy as jnp
from jax import lax
from jax.experimental import pallas as pl
from jax.experimental.pallas import tpu as pltpu

# "config" constants (stand-in for the pointnerf config object)
VSIZE = np.array([0.008, 0.008, 0.008], dtype=np.float32)

_LANE = 128
_W2PERS_SUBLANES = 512      # 512 sublanes x 128 lanes = 64K points / step (~768 KB block)
GATHER_ROWS = 16            # rows gathered per grid step (multiple of 8 -> dense stores)


def _round_up(x, m):
    return (x + m - 1) // m * m


# --------------------------------------------------------------------------- #
# Kernel 1: w2pers_loc on sublane+lane dense (3, S, 128) tiles
# --------------------------------------------------------------------------- #
def _w2pers_kernel(cam_ref,    # SMEM (12,) f32 : camrotc2w row-major (9) ++ campos (3)
                   pts_ref,    # VMEM (3, S, 128) f32 : x / y / z planes
                   out_ref):   # VMEM (3, S, 128) f32 : [x/z, y/z, z]
    r00 = cam_ref[0]; r01 = cam_ref[1]; r02 = cam_ref[2]
    r10 = cam_ref[3]; r11 = cam_ref[4]; r12 = cam_ref[5]
    r20 = cam_ref[6]; r21 = cam_ref[7]; r22 = cam_ref[8]
    c0 = cam_ref[9]; c1 = cam_ref[10]; c2 = cam_ref[11]

    sx = pts_ref[0] - c0                   # (S, 128) full-tile VPU ops
    sy = pts_ref[1] - c1
    sz = pts_ref[2] - c2
    # xyz_c[j] = sum_i shift[i] * rot[i, j]   (== shift @ camrotc2w)
    xc = sx * r00 + sy * r10 + sz * r20
    yc = sx * r01 + sy * r11 + sz * r21
    zc = sx * r02 + sy * r12 + sz * r22
    # Exact reciprocal (EUP path, approx=False preserves the 1e-5 tolerance).
    # NOTE: like the PyTorch original, z == 0 -> inf/nan (padding uses z = 1).
    inv_z = pl.reciprocal(zc, approx=False)
    out_ref[0] = xc * inv_z                # direct row stores, no concat
    out_ref[1] = yc * inv_z
    out_ref[2] = zc


def w2pers_pallas(cam, pts):
    """pts: (M, 3) f32 world coords.  Returns (M, 3) [x/z, y/z, z]."""
    m = pts.shape[0]
    lanes = _round_up(max(m, 1), _LANE)
    n_blocks = lanes // _LANE
    s_tile = min(_W2PERS_SUBLANES, _round_up(n_blocks, 8))
    n_blk_pad = _round_up(n_blocks, s_tile)
    m_pad = n_blk_pad * _LANE

    # pad with z=1 rows so the perspective divide stays finite on padding
    pts_pad = jnp.concatenate(
        [pts.astype(jnp.float32), jnp.ones((m_pad - m, 3), jnp.float32)], axis=0)
    pts3 = pts_pad.T.reshape(3, n_blk_pad, _LANE)   # lane/sublane-dense layout

    out3 = pl.pallas_call(
        _w2pers_kernel,
        out_shape=jax.ShapeDtypeStruct((3, n_blk_pad, _LANE), jnp.float32),
        grid=(n_blk_pad // s_tile,),
        in_specs=[
            pl.BlockSpec(memory_space=pltpu.MemorySpace.SMEM),        # cam scalars
            pl.BlockSpec((3, s_tile, _LANE), lambda i: (0, i, 0)),    # point tile
        ],
        out_specs=pl.BlockSpec((3, s_tile, _LANE), lambda i: (0, i, 0)),
        compiler_params=pltpu.CompilerParams(
            dimension_semantics=("parallel",)),
        cost_estimate=pl.CostEstimate(
            flops=20 * m_pad,
            transcendentals=m_pad,
            bytes_accessed=2 * 3 * m_pad * 4),
    )(cam, pts3)
    return out3.reshape(3, m_pad).T[:m]


# --------------------------------------------------------------------------- #
# Kernel 2: batched DMA row gather + fused w2pers of the gathered point xyz
# --------------------------------------------------------------------------- #
def _gather_kernel(pidx_ref,   # SMEM (mi_pad,) i32 : clamped point indices
                   cam_ref,    # SMEM (12,)   f32 : camrotc2w (9) ++ campos (3)
                   tbl_ref,    # HBM  (N, c_pad) f32 : static feature table
                   out_ref,    # VMEM (G, c_pad) f32
                   buf_ref,    # VMEM (G, c_pad) f32 scratch (gather landing zone)
                   sems):      # DMA semaphores (G,)
    base = pl.program_id(0) * GATHER_ROWS

    # Issue all G row DMAs (overlapping random-row fetch latencies), then wait.
    copies = []
    for g in range(GATHER_ROWS):               # static unrolled
        row = pidx_ref[base + g]
        cp = pltpu.make_async_copy(tbl_ref.at[pl.ds(row, 1)],
                                   buf_ref.at[pl.ds(g, 1)],
                                   sems.at[g])
        cp.start()
        copies.append(cp)
    for cp in copies:
        cp.wait()

    feat = buf_ref[...]                        # (G, c_pad) lane+sublane dense

    # Fused w2pers of the gathered point xyz -> fill pers channels [3:6].
    r00 = cam_ref[0]; r01 = cam_ref[1]; r02 = cam_ref[2]
    r10 = cam_ref[3]; r11 = cam_ref[4]; r12 = cam_ref[5]
    r20 = cam_ref[6]; r21 = cam_ref[7]; r22 = cam_ref[8]
    c0 = cam_ref[9]; c1 = cam_ref[10]; c2 = cam_ref[11]
    sx = feat[:, 0:1] - c0
    sy = feat[:, 1:2] - c1
    sz = feat[:, 2:3] - c2
    xc = sx * r00 + sy * r10 + sz * r20
    yc = sx * r01 + sy * r11 + sz * r21
    zc = sx * r02 + sy * r12 + sz * r22
    inv_z = pl.reciprocal(zc, approx=False)

    # Merge pers columns in-register and do ONE unmasked full-tile store.
    col = lax.broadcasted_iota(jnp.int32, feat.shape, 1)
    merged = jnp.where(col == 3, xc * inv_z, feat)
    merged = jnp.where(col == 4, yc * inv_z, merged)
    merged = jnp.where(col == 5, zc, merged)
    out_ref[...] = merged


def gather_rows_pallas(table, pidx, cam):
    """table: (N, c_pad) f32 in HBM; pidx: (Mi,) i32 clamped indices; cam: (12,) f32."""
    _, c_pad = table.shape
    mi = pidx.shape[0]
    mi_pad = _round_up(mi, GATHER_ROWS)
    pidx_pad = jnp.concatenate(
        [pidx.astype(jnp.int32), jnp.zeros((mi_pad - mi,), jnp.int32)], axis=0)
    steps = mi_pad // GATHER_ROWS

    return pl.pallas_call(
        _gather_kernel,
        out_shape=jax.ShapeDtypeStruct((mi_pad, c_pad), jnp.float32),
        grid=(steps,),
        in_specs=[
            pl.BlockSpec(memory_space=pltpu.MemorySpace.SMEM),   # pidx
            pl.BlockSpec(memory_space=pltpu.MemorySpace.SMEM),   # cam
            pl.BlockSpec(memory_space=pl.ANY),                   # table stays in HBM
        ],
        out_specs=pl.BlockSpec((GATHER_ROWS, c_pad), lambda i: (i, 0)),
        scratch_shapes=[pltpu.VMEM((GATHER_ROWS, c_pad), jnp.float32),
                        pltpu.SemaphoreType.DMA((GATHER_ROWS,))],
        compiler_params=pltpu.CompilerParams(
            dimension_semantics=("parallel",)),
        cost_estimate=pl.CostEstimate(
            flops=20 * mi_pad,
            transcendentals=mi_pad,
            bytes_accessed=2 * mi_pad * c_pad * 4 + mi_pad * 4),
    )(pidx_pad, cam, table)


# --------------------------------------------------------------------------- #
# Static feature table (camera-independent -> built ONCE, outside the forward)
# Layout: [xyz(3) | pers placeholder(3, filled in-kernel) | emb(C) | color(3)
#          | dir(3) | conf(1)] padded to a 128-lane multiple.
# --------------------------------------------------------------------------- #
def prepare_feature_table(params):
    xyz = params["xyz"].astype(jnp.float32)      # (N, 3)
    emb = params["embedding"][0].astype(jnp.float32)
    color = params["color"][0].astype(jnp.float32)
    pdir = params["dir"][0].astype(jnp.float32)
    conf = params["conf"][0].astype(jnp.float32)
    n = xyz.shape[0]
    table = jnp.concatenate(
        [xyz, jnp.zeros((n, 3), jnp.float32), emb, color, pdir, conf], axis=-1)
    c_tab = table.shape[1]
    c_pad = _round_up(c_tab, _LANE)
    return jnp.pad(table, ((0, 0), (0, c_pad - c_tab)))


# --------------------------------------------------------------------------- #
# Forward pass (post voxel-grid query)
# --------------------------------------------------------------------------- #
def neural_points_forward(params, cam_rot, cam_pos, ray_dirs,
                          sample_pidx, sample_loc_w, ray_mask, table=None):
    """JAX/Pallas equivalent of NeuralPoints.forward (post voxel-grid query)."""
    points_Rw2c = params["Rw2c"]                 # (3, 3)
    C = params["embedding"].shape[-1]
    if table is None:                            # hoist this out of the hot path
        table = prepare_feature_table(params)

    B, Rp, SR, K = sample_pidx.shape

    # TODO(synk): near_far_linear_ray_generation + get_hyperparameters only feed the
    # untranslatable CUDA voxel-grid query, so they are not reproduced here.

    sample_pnt_mask = sample_pidx >= 0
    # INVARIANT: invalid (-1) indices are clamped to 0 and silently gather point 0's
    # features/pers coords; downstream code must apply sample_pnt_mask (as in PyTorch).
    pidx_flat = jnp.clip(sample_pidx, 0, None).reshape(-1).astype(jnp.int32)
    loc_w_flat = sample_loc_w.reshape(-1, 3).astype(jnp.float32)
    mi = pidx_flat.shape[0]

    cam = jnp.concatenate([cam_rot.reshape(-1), cam_pos.reshape(-1)]).astype(jnp.float32)

    # ---- kernel 1: lane+sublane dense perspective transform of the sample locations
    sample_loc = w2pers_pallas(cam, loc_w_flat).reshape(B, Rp, SR, 3)   # w2pers_loc

    # ---- kernel 2: batched DMA row gather (+ fused w2pers of the gathered xyz)
    gath = gather_rows_pallas(table, pidx_flat, cam)[:mi]
    gath = gath.reshape(B, Rp, SR, K, -1)

    sampled_xyz = gath[..., 0:3]
    sampled_pers = gath[..., 3:6]
    sampled_emb = gath[..., 6:6 + C]
    sampled_color = gath[..., 6 + C:9 + C]
    sampled_dir = gath[..., 9 + C:12 + C]
    sampled_conf = gath[..., 12 + C:13 + C]

    # torch.masked_select(ray_dirs, ray_mask>0): active-ray count must be static in
    # JAX; here it equals Rp (synthetic mask).  With fewer actives the fill index 0
    # would duplicate ray 0's direction — glue, not kernel work.
    active_idx = jnp.nonzero(ray_mask[0] > 0, size=Rp)[0]
    sel_dirs = jnp.take(ray_dirs, active_idx, axis=1)                   # (B, Rp, 3)
    sample_ray_dirs = jnp.broadcast_to(sel_dirs[:, :, None, :], (B, Rp, SR, 3))

    sampled_Rw2c = points_Rw2c   # dim == 2 branch of the PyTorch module

    vsize_np = np.asarray(VSIZE, dtype=np.float32)
    return (sampled_color, sampled_Rw2c, sampled_dir, sampled_emb, sampled_pers,
            sampled_xyz, sampled_conf, sample_loc, sample_loc_w, sample_pnt_mask,
            sample_ray_dirs, vsize_np, ray_mask)


if __name__ == "__main__":
    key = jax.random.PRNGKey(0)
    N, C = 64, 32                 # neural points / embedding channels
    B, R, Rp, SR, K = 1, 8, 4, 4, 4

    ks = jax.random.split(key, 8)

    # deterministic "state_dict" parameters
    points_xyz = jax.random.uniform(ks[0], (N, 3), jnp.float32) + jnp.array([0.0, 0.0, 2.0])
    points_emb = jax.random.normal(ks[1], (1, N, C), jnp.float32)
    points_conf = jax.random.uniform(ks[2], (1, N, 1), jnp.float32)
    points_dir = jax.random.normal(ks[3], (1, N, 3), jnp.float32)
    points_color = jax.random.uniform(ks[4], (1, N, 3), jnp.float32)
    points_Rw2c = jnp.eye(3, dtype=jnp.float32)

    # camera (ray_bundle metadata)
    th = 0.1
    cam_rot = jnp.array([[np.cos(th), -np.sin(th), 0.0],
                         [np.sin(th), np.cos(th), 0.0],
                         [0.0, 0.0, 1.0]], jnp.float32)[None]            # camrotc2w (1,3,3)
    cam_pos = jnp.array([[0.1, -0.1, 0.0]], jnp.float32)                  # (1,3)
    ray_dirs = jax.random.normal(ks[5], (1, R, 3), jnp.float32)
    ray_dirs = ray_dirs / jnp.linalg.norm(ray_dirs, axis=-1, keepdims=True)

    # TODO(synk): query_worldcoords_cuda (voxel-grid neighbor query) has no Pallas
    # equivalent; its outputs are synthesized deterministically here.
    ray_mask = jnp.concatenate([jnp.ones((1, Rp), jnp.int32),
                                jnp.zeros((1, R - Rp), jnp.int32)], axis=1)
    sample_pidx = jax.random.randint(ks[6], (B, Rp, SR, K), -1, N, dtype=jnp.int32)
    sample_loc_w = jax.random.uniform(ks[7], (B, Rp, SR, 3), jnp.float32) + jnp.array([0.0, 0.0, 2.0])

    params = dict(xyz=points_xyz, embedding=points_emb, color=points_color,
                  dir=points_dir, conf=points_conf, Rw2c=points_Rw2c)

    # Static feature table built once (params are constant across forwards).
    table = prepare_feature_table(params)

    out = neural_points_forward(params, cam_rot, cam_pos, ray_dirs,
                                sample_pidx, sample_loc_w, ray_mask, table=table)
    jax.block_until_ready([o for o in out if isinstance(o, jax.Array)])

    # ---------------- pure-JAX reference check ----------------
    rot = cam_rot.reshape(3, 3)
    pos = cam_pos.reshape(3)

    def pers_ref(p):
        shift = p - pos
        xyz_c = jnp.matmul(shift, rot, precision=jax.lax.Precision.HIGHEST)
        return jnp.stack([xyz_c[..., 0] / xyz_c[..., 2],
                          xyz_c[..., 1] / xyz_c[..., 2],
                          xyz_c[..., 2]], axis=-1)

    pidx = jnp.clip(sample_pidx, 0, None).reshape(-1)
    table_ref = jnp.concatenate([points_xyz, points_emb[0], points_color[0],
                                 points_dir[0], points_conf[0]], axis=-1)
    gath_ref = jnp.take(table_ref, pidx, axis=0).reshape(B, Rp, SR, K, -1)
    gpers_ref = jnp.take(pers_ref(points_xyz), pidx, axis=0).reshape(B, Rp, SR, K, 3)
    loc_ref = pers_ref(sample_loc_w.reshape(-1, 3)).reshape(B, Rp, SR, 3)

    np.testing.assert_allclose(np.asarray(out[5]), np.asarray(gath_ref[..., :3]), rtol=1e-5, atol=1e-5)
    np.testing.assert_allclose(np.asarray(out[3]), np.asarray(gath_ref[..., 3:3 + C]), rtol=1e-5, atol=1e-5)
    np.testing.assert_allclose(np.asarray(out[0]), np.asarray(gath_ref[..., 3 + C:6 + C]), rtol=1e-5, atol=1e-5)
    np.testing.assert_allclose(np.asarray(out[2]), np.asarray(gath_ref[..., 6 + C:9 + C]), rtol=1e-5, atol=1e-5)
    np.testing.assert_allclose(np.asarray(out[6]), np.asarray(gath_ref[..., 9 + C:10 + C]), rtol=1e-5, atol=1e-5)
    np.testing.assert_allclose(np.asarray(out[4]), np.asarray(gpers_ref), rtol=1e-5, atol=1e-5)
    np.testing.assert_allclose(np.asarray(out[7]), np.asarray(loc_ref), rtol=1e-5, atol=1e-5)

    print("KERNEL_OK")
</pallas_src>

<mosaic_0001>
module attributes {stable_mosaic.version = 11 : i64} {
  func.func @_w2pers_kernel(%arg0: i32, %arg1: memref<12xf32, #tpu.memory_space<smem>>, %arg2: memref<3x8x128xf32, #tpu.memory_space<vmem>>, %arg3: memref<3x8x128xf32, #tpu.memory_space<vmem>>) attributes {dimension_semantics = [#tpu.dimension_semantics<parallel>], iteration_bounds = array<i64: 1>, scalar_prefetch = 0 : i64, scratch_operands = 0 : i64, tpu.core_type = #tpu.core_type<tc>, window_params = [{transform_indices = @transform_0, window_bounds = array<i64: 12>}, {transform_indices = @transform_1, window_bounds = array<i64: 3, 8, 128>}, {transform_indices = @transform_2, window_bounds = array<i64: 3, 8, 128>}]} {
    %c0 = arith.constant 0 : index
    %0 = memref.load %arg1[%c0] : memref<12xf32, #tpu.memory_space<smem>>
    %c1 = arith.constant 1 : index
    %1 = memref.load %arg1[%c1] : memref<12xf32, #tpu.memory_space<smem>>
    %c2 = arith.constant 2 : index
    %2 = memref.load %arg1[%c2] : memref<12xf32, #tpu.memory_space<smem>>
    %c3 = arith.constant 3 : index
    %3 = memref.load %arg1[%c3] : memref<12xf32, #tpu.memory_space<smem>>
    %c4 = arith.constant 4 : index
    %4 = memref.load %arg1[%c4] : memref<12xf32, #tpu.memory_space<smem>>
    %c5 = arith.constant 5 : index
    %5 = memref.load %arg1[%c5] : memref<12xf32, #tpu.memory_space<smem>>
    %c6 = arith.constant 6 : index
    %6 = memref.load %arg1[%c6] : memref<12xf32, #tpu.memory_space<smem>>
    %c7 = arith.constant 7 : index
    %7 = memref.load %arg1[%c7] : memref<12xf32, #tpu.memory_space<smem>>
    %c8 = arith.constant 8 : index
    %8 = memref.load %arg1[%c8] : memref<12xf32, #tpu.memory_space<smem>>
    %c9 = arith.constant 9 : index
    %9 = memref.load %arg1[%c9] : memref<12xf32, #tpu.memory_space<smem>>
    %c10 = arith.constant 10 : index
    %10 = memref.load %arg1[%c10] : memref<12xf32, #tpu.memory_space<smem>>
    %c11 = arith.constant 11 : index
    %11 = memref.load %arg1[%c11] : memref<12xf32, #tpu.memory_space<smem>>
    %c0_0 = arith.constant 0 : index
    %c0_1 = arith.constant 0 : index
    %c0_2 = arith.constant 0 : index
    %12 = vector.load %arg2[%c0_0, %c0_1, %c0_2] : memref<3x8x128xf32, #tpu.memory_space<vmem>>, vector<1x8x128xf32>
    %13 = vector.shape_cast %12 : vector<1x8x128xf32> to vector<8x128xf32>
    %14 = vector.broadcast %9 : f32 to vector<8x128xf32>
    %15 = arith.subf %13, %14 : vector<8x128xf32>
    %c1_3 = arith.constant 1 : index
    %c0_4 = arith.constant 0 : index
    %c0_5 = arith.constant 0 : index
    %16 = vector.load %arg2[%c1_3, %c0_4, %c0_5] : memref<3x8x128xf32, #tpu.memory_space<vmem>>, vector<1x8x128xf32>
    %17 = vector.shape_cast %16 : vector<1x8x128xf32> to vector<8x128xf32>
    %18 = vector.broadcast %10 : f32 to vector<8x128xf32>
    %19 = arith.subf %17, %18 : vector<8x128xf32>
    %c2_6 = arith.constant 2 : index
    %c0_7 = arith.constant 0 : index
    %c0_8 = arith.constant 0 : index
    %20 = vector.load %arg2[%c2_6, %c0_7, %c0_8] : memref<3x8x128xf32, #tpu.memory_space<vmem>>, vector<1x8x128xf32>
    %21 = vector.shape_cast %20 : vector<1x8x128xf32> to vector<8x128xf32>
    %22 = vector.broadcast %11 : f32 to vector<8x128xf32>
    %23 = arith.subf %21, %22 : vector<8x128xf32>
    %24 = vector.broadcast %0 : f32 to vector<8x128xf32>
    %25 = arith.mulf %15, %24 : vector<8x128xf32>
    %26 = vector.broadcast %3 : f32 to vector<8x128xf32>
    %27 = arith.mulf %19, %26 : vector<8x128xf32>
    %28 = arith.addf %25, %27 : vector<8x128xf32>
    %29 = vector.broadcast %6 : f32 to vector<8x128xf32>
    %30 = arith.mulf %23, %29 : vector<8x128xf32>
    %31 = arith.addf %28, %30 : vector<8x128xf32>
    %32 = vector.broadcast %1 : f32 to vector<8x128xf32>
    %33 = arith.mulf %15, %32 : vector<8x128xf32>
    %34 = vector.broadcast %4 : f32 to vector<8x128xf32>
    %35 = arith.mulf %19, %34 : vector<8x128xf32>
    %36 = arith.addf %33, %35 : vector<8x128xf32>
    %37 = vector.broadcast %7 : f32 to vector<8x128xf32>
    %38 = arith.mulf %23, %37 : vector<8x128xf32>
    %39 = arith.addf %36, %38 : vector<8x128xf32>
    %40 = vector.broadcast %2 : f32 to vector<8x128xf32>
    %41 = arith.mulf %15, %40 : vector<8x128xf32>
    %42 = vector.broadcast %5 : f32 to vector<8x128xf32>
    %43 = arith.mulf %19, %42 : vector<8x128xf32>
    %44 = arith.addf %41, %43 : vector<8x128xf32>
    %45 = vector.broadcast %8 : f32 to vector<8x128xf32>
    %46 = arith.mulf %23, %45 : vector<8x128xf32>
    %47 = arith.addf %44, %46 : vector<8x128xf32>
    %48 = tpu.reciprocal %47 : vector<8x128xf32> -> vector<8x128xf32>
    %49 = arith.mulf %31, %48 : vector<8x128xf32>
    %c0_9 = arith.constant 0 : index
    %c0_10 = arith.constant 0 : index
    %c0_11 = arith.constant 0 : index
    %50 = vector.load %arg3[%c0_9, %c0_10, %c0_11] : memref<3x8x128xf32, #tpu.memory_space<vmem>>, vector<1x8x128xf32>
    %51 = vector.shape_cast %50 : vector<1x8x128xf32> to vector<8x128xf32>
    %52 = vector.shape_cast %49 : vector<8x128xf32> to vector<1x8x128xf32>
    tpu.vector_store %arg3[%c0_9, %c0_10, %c0_11], %52 {strides = array<i32>} : memref<3x8x128xf32, #tpu.memory_space<vmem>>, vector<1x8x128xf32>,
    %53 = arith.mulf %39, %48 : vector<8x128xf32>
    %c1_12 = arith.constant 1 : index
    %c0_13 = arith.constant 0 : index
    %c0_14 = arith.constant 0 : index
    %54 = vector.load %arg3[%c1_12, %c0_13, %c0_14] : memref<3x8x128xf32, #tpu.memory_space<vmem>>, vector<1x8x128xf32>
    %55 = vector.shape_cast %54 : vector<1x8x128xf32> to vector<8x128xf32>
    %56 = vector.shape_cast %53 : vector<8x128xf32> to vector<1x8x128xf32>
    tpu.vector_store %arg3[%c1_12, %c0_13, %c0_14], %56 {strides = array<i32>} : memref<3x8x128xf32, #tpu.memory_space<vmem>>, vector<1x8x128xf32>,
    %c2_15 = arith.constant 2 : index
    %c0_16 = arith.constant 0 : index
    %c0_17 = arith.constant 0 : index
    %57 = vector.load %arg3[%c2_15, %c0_16, %c0_17] : memref<3x8x128xf32, #tpu.memory_space<vmem>>, vector<1x8x128xf32>
    %58 = vector.shape_cast %57 : vector<1x8x128xf32> to vector<8x128xf32>
    %59 = vector.shape_cast %47 : vector<8x128xf32> to vector<1x8x128xf32>
    tpu.vector_store %arg3[%c2_15, %c0_16, %c0_17], %59 {strides = array<i32>} : memref<3x8x128xf32, #tpu.memory_space<vmem>>, vector<1x8x128xf32>,
    return
  }
  func.func @transform_0(%arg0: i32) -> i32 {
    %c0_i32 = arith.constant 0 : i32
    %c0_i32_0 = arith.constant 0 : i32
    return %c0_i32 : i32
  }
  func.func @transform_1(%arg0: i32) -> (i32, i32, i32) {
    %c0_i32 = arith.constant 0 : i32
    %c0_i32_0 = arith.constant 0 : i32
    %c0_i32_1 = arith.constant 0 : i32
    return %c0_i32, %arg0, %c0_i32_0 : i32, i32, i32
  }
  func.func @transform_2(%arg0: i32) -> (i32, i32, i32) {
    %c0_i32 = arith.constant 0 : i32
    %c0_i32_0 = arith.constant 0 : i32
    %c0_i32_1 = arith.constant 0 : i32
    return %c0_i32, %arg0, %c0_i32_0 : i32, i32, i32
  }
}

</mosaic_0001>

<llo_original>
// kernel: tpu_custom_call.1
$region0: #{tpu_custom_call.1}
  #allocation0 [shape = 'u32[]', space=smem, size = 0x4, offset = 0x4, fixed_abs, tag = 'smem constant byte address 0x4 - core index']
  #allocation1 [shape = 'u32[144,128]{1,0:T(1,128)}', space=vmem, size = 0x12000, scoped, tag = 'internal scratch']
  %s0 = inlined_call_operand.hbm [shape: f32[12], index: 0, kind: input, shape index: {}]
  %s1 = inlined_call_operand.hbm [shape: f32[3,8,128], index: 1, kind: input, shape index: {}]
  %s2 = inlined_call_operand.hbm [shape: f32[3,8,128], index: 2, kind: output, shape index: {}]
  %s3 = sld [smem:[#allocation0]]
  $region26: #{tpu_custom_call.1} parent=0
    _
  %s5 = ssub.s32 1, %s3
  %s6 = scalar_select 0, %s5, %s3
  $region1: #{tpu_custom_call.1} parent=0
    #allocation2 [shape = 'u8[512]{0}', space=smem, size = 0x200, scoped, tag = 'input window, operand 0, single buffered']
    #allocation3 [shape = 's32[1]{0}', space=sflag, size = 0x4, scoped, tag = 'scoped memory for tpu_custom_call.1']
    #allocation4 [shape = 's32[1]{0}', space=sflag, size = 0x4, scoped, tag = 'scoped memory for tpu_custom_call.1']
    #allocation5 [shape = 's32[1]{0}', space=sflag, size = 0x4, scoped, tag = 'scoped memory for tpu_custom_call.1']
    #allocation6 [shape = 'u8[12288]{0}', space=vmem, size = 0x3000, scoped, tag = 'input window, operand 1, single buffered']
    #allocation7 [shape = 'u8[12288]{0}', space=vmem, size = 0x3000, scoped, tag = 'output window, operand 0, single buffered']
    %7 = vsyncpa [#allocation5], 0
    %8 = vsyncpa [#allocation3], 0
    %9 = vsyncpa [#allocation4], 0
    // Predicated region
    $region2: #{tpu_custom_call.1} parent=1 // pred_check
      _
    $region3: #{tpu_custom_call.1} parent=1 // pred_check_branch
      %11 = sbr.rel (0) target = $region5
    $region4: #{tpu_custom_call.1} parent=1 // pred_region
      %s13 = ssub.s32 16, 16
      %14 = vsyncadd [#allocation5], %s13
      %17 = dma.hbm_to_smem %s0, 16, [#allocation2], [#allocation5]
    $region5: #{tpu_custom_call.1} parent=1 // pred_fallthru
      _
    // Predicated region
    $region6: #{tpu_custom_call.1} parent=1 // pred_check
      _
    $region7: #{tpu_custom_call.1} parent=1 // pred_check_branch
      %19 = sbr.rel (0) target = $region9
    $region8: #{tpu_custom_call.1} parent=1 // pred_region
      %s21 = ssub.s32 384, 384
      %22 = vsyncadd [#allocation3], %s21
      %s23 = sshll.u32 [#allocation6], 4
      %s24 = int_to_ptr.vmem [resolvable:$true] %s23
      %29 = dma.hbm_to_vmem [thread:$0]  %s1, 384, %s24, [#allocation3], 128, 128, 8
    $region9: #{tpu_custom_call.1} parent=1 // pred_fallthru
      _
    // Predicated region
    $region10: #{tpu_custom_call.1} parent=1 // pred_check
      _
    $region11: #{tpu_custom_call.1} parent=1 // pred_check_branch
      %31 = sbr.rel (0) target = $region13
    $region12: #{tpu_custom_call.1} parent=1 // pred_region
      %32 = dma.done [#allocation5], 16
    $region13: #{tpu_custom_call.1} parent=1 // pred_fallthru
      _
    // Predicated region
    $region14: #{tpu_custom_call.1} parent=1 // pred_check
      _
    $region15: #{tpu_custom_call.1} parent=1 // pred_check_branch
      %34 = sbr.rel (0) target = $region17
    $region16: #{tpu_custom_call.1} parent=1 // pred_region
      %35 = dma.done [#allocation3], 384
    $region17: #{tpu_custom_call.1} parent=1 // pred_fallthru
      _
    %36 = sfence
    %s37 = sld [smem:[#allocation2]]
    %s38 = sld [smem:[#allocation2 + $0x1]]
    %s39 = sld [smem:[#allocation2 + $0x2]]
    %s40 = sld [smem:[#allocation2 + $0x3]]
    %s41 = sld [smem:[#allocation2 + $0x4]]
    %s42 = sld [smem:[#allocation2 + $0x5]]
    %s43 = sld [smem:[#allocation2 + $0x6]]
    %s44 = sld [smem:[#allocation2 + $0x7]]
    %s45 = sld [smem:[#allocation2 + $0x8]]
    %s46 = sld [smem:[#allocation2 + $0x9]]
    %s47 = sld [smem:[#allocation2 + $0xa]]
    %s48 = sld [smem:[#allocation2 + $0xb]]
    %v49 = vld [vmem:[#allocation6] sm:$0xff]
    %v50 = vstv %s46
    %v51 = vsub.f32 %v49, %v50
    %s52 = scalar_lea.vmem [#allocation6], 8
    %v53 = vld [vmem:[%s52] sm:$0xff]
    %v54 = vstv %s47
    %v55 = vsub.f32 %v53, %v54
    %s56 = scalar_lea.vmem [#allocation6], 16
    %v57 = vld [vmem:[%s56] sm:$0xff]
    %v58 = vstv %s48
    %v59 = vsub.f32 %v57, %v58
    %v60 = vstv %s37
    %v61 = vmul.f32 %v51, %v60
    %v62 = vstv %s40
    %v63 = vmul.f32 %v55, %v62
    %v64 = vadd.f32 %v61, %v63
    %v65 = vstv %s43
    %v66 = vmul.f32 %v59, %v65
    %v67 = vadd.f32 %v64, %v66
    %v68 = vstv %s38
    %v69 = vmul.f32 %v51, %v68
    %v70 = vstv %s41
    %v71 = vmul.f32 %v55, %v70
    %v72 = vadd.f32 %v69, %v71
    %v73 = vstv %s44
    %v74 = vmul.f32 %v59, %v73
    %v75 = vadd.f32 %v72, %v74
    %v76 = vstv %s39
    %v77 = vmul.f32 %v51, %v76
    %v78 = vstv %s42
    %v79 = vmul.f32 %v55, %v78
    %v80 = vadd.f32 %v77, %v79
    %v81 = vstv %s45
    %v82 = vmul.f32 %v59, %v81
    %v83 = vadd.f32 %v80, %v82
    %v84 = vrcp.pop %v83
    %v85 = vmul.f32 %v67, %v84
    %86 = vst [vmem:[#allocation7] sm:$0xff] %v85
    %v87 = vmul.f32 %v75, %v84
    %s88 = scalar_lea.vmem [#allocation7], 8
    %89 = vst [vmem:[%s88] sm:$0xff] %v87
    %s90 = scalar_lea.vmem [#allocation7], 16
    %91 = vst [vmem:[%s90] sm:$0xff] %v83
    // Predicated region
    $region18: #{tpu_custom_call.1} parent=1 // pred_check
      _
    $region19: #{tpu_custom_call.1} parent=1 // pred_check_branch
      %93 = sbr.rel (0) target = $region21
    $region20: #{tpu_custom_call.1} parent=1 // pred_region
      %s95 = ssub.s32 384, 384
      %96 = vsyncadd [#allocation4], %s95
      %s97 = sshll.u32 [#allocation7], 4
      %s98 = int_to_ptr.vmem [resolvable:$true] %s97
      %103 = dma.vmem_to_hbm [thread:$0]  %s98, 384, %s2, [#allocation4], 128, 128, 8
    $region21: #{tpu_custom_call.1} parent=1 // pred_fallthru
      _
    // Predicated region
    $region22: #{tpu_custom_call.1} parent=1 // pred_check
      _
    $region23: #{tpu_custom_call.1} parent=1 // pred_check_branch
      %105 = sbr.rel (0) target = $region25
    $region24: #{tpu_custom_call.1} parent=1 // pred_region
      %106 = dma.done [#allocation4], 384
    $region25: #{tpu_custom_call.1} parent=1 // pred_fallthru
      _
    %107 = vsyncpa [#allocation3], 1
    %108 = vsyncpa [#allocation4], 1
    %109 = vsyncpa [#allocation5], 1

</llo_original>
